<compile_context>
chip_gen: v6e
topology: v6e:2x2x1
jax: 0.10.0
libtpu: 0.0.40
codegen_flags: <defaults>
</compile_context>

<pallas_src>
import jax
import jax.numpy as jnp
from jax.experimental import pallas as pl
from jax.experimental.pallas import tpu as pltpu


def diagonal_kernel(x_ref, wb_ref, o_ref):
    x = x_ref[...]            # (tile_b, D)
    w = wb_ref[0:1, :]        # (1, D) -> broadcast over the batch (sublane) axis
    b = wb_ref[1:2, :]        # (1, D)
    o_ref[...] = (x * w + b).astype(o_ref.dtype)   # FMA-form, no temporaries


def _vmem_params():
    """(tile VMEM budget, scoped vmem_limit_bytes) per TPU generation."""
    cap = 64 << 20                                   # conservative fallback (v7x)
    try:
        cap = int(getattr(pltpu.get_tpu_info(), "vmem_capacity_bytes", cap))
    except Exception:
        cap = 64 << 20
    if cap <= (64 << 20):                            # v7x-class: 64 MiB per TC
        return 24 << 20, 48 << 20
    return 32 << 20, 64 << 20                        # v5e / v6e: 128 MiB physical


def _choose_tile_b(B, D, itemsize, vmem_budget_bytes, target_block_bytes=2 << 20):
    """Pick a batch tile sized by block bytes (~2 MiB), dtype/sublane aware."""
    sublane = max(8, 32 // max(1, itemsize))         # f32: 8, bf16: 16, int8/fp8: 32
    per_row = max(1, D * itemsize)
    # Pipeline holds 2 double-buffered blocks for x and 2 for the output.
    rows_budget = max(sublane, vmem_budget_bytes // (4 * per_row))
    rows_target = max(sublane, target_block_bytes // per_row)
    tile = min(rows_target, rows_budget)
    if tile >= B:
        return B                                     # single full-extent block
    tile = max(sublane, (tile // sublane) * sublane)

    # Prefer a tile that divides B exactly (no ragged tail step, balanced split).
    cand = tile
    while cand >= sublane:
        if B % cand == 0:
            tile = cand
            # v7x: prefer an even step count so both TensorCores stay busy.
            steps = B // tile
            if steps > 1 and steps % 2 == 1:
                half = (tile // 2 // sublane) * sublane
                if half >= sublane and B % half == 0 and (B // half) % 2 == 0:
                    tile = half
            return tile
        cand -= sublane
    # No nice divisor: keep the byte-sized tile; Pallas masks the ragged last
    # block (padded reads, discarded out-of-bounds writes) — no wrapper pad.
    return tile


def diagonal(x, weight, bias, *, tile_b=None, min_bytes_for_pallas=256 << 10,
             donate_x=False):
    """Pallas implementation of Diagonal.forward: x * weight + bias.

    x: (..., dim); weight, bias: (dim,).
    """
    D = x.shape[-1]
    orig_shape = x.shape
    weight = jnp.asarray(weight, x.dtype)            # avoid silent upcast
    bias = jnp.asarray(bias, x.dtype)

    # Tiny problems: a fused jnp expression beats a standalone pallas_call.
    if x.size * x.dtype.itemsize < min_bytes_for_pallas:
        return x * weight + bias

    x2 = x.reshape(-1, D) if x.ndim != 2 else x
    B = x2.shape[0]

    vmem_budget, vmem_limit = _vmem_params()
    if tile_b is None:
        tile_b = _choose_tile_b(B, D, x.dtype.itemsize, vmem_budget)
    tile_b = min(tile_b, B)
    steps = -(-B // tile_b)

    # Packed params: one (2, D) block -> one DMA descriptor / double-buffer.
    wb = jnp.stack([weight, bias], axis=0)

    kwargs = {}
    if donate_x:
        # Only enable when the caller donates x (e.g. jit donate_argnums);
        # reuses x's HBM buffer for the output.
        kwargs["input_output_aliases"] = {0: 0}

    out = pl.pallas_call(
        diagonal_kernel,
        out_shape=jax.ShapeDtypeStruct((B, D), x.dtype),
        grid_spec=pltpu.PrefetchScalarGridSpec(
            num_scalar_prefetch=0,
            grid=(steps,),
            in_specs=[
                # Last block dim = full D (full-extent exception), so ragged D
                # needs no padding; tile_b is either a sublane multiple or == B.
                pl.BlockSpec((tile_b, D), lambda i: (i, 0)),
                pl.BlockSpec((2, D), lambda i: (0, 0)),
            ],
            out_specs=pl.BlockSpec((tile_b, D), lambda i: (i, 0)),
        ),
        compiler_params=pltpu.CompilerParams(
            dimension_semantics=("parallel",),
            vmem_limit_bytes=vmem_limit,
        ),
        **kwargs,
    )(x2, wb)

    if x.ndim != 2:
        out = out.reshape(orig_shape)
    return out


if __name__ == "__main__":
    key = jax.random.PRNGKey(0)
    kx, kw, kb = jax.random.split(key, 3)

    # --- Test 1: small batch, lane-aligned feature dim ----------------------
    B, D = 16, 128
    x = jax.random.normal(kx, (B, D), dtype=jnp.float32)
    # Module init is weight=ones, bias=zeros; perturb so the check is non-trivial.
    weight = jnp.ones((D,), jnp.float32) + 0.1 * jax.random.normal(kw, (D,), jnp.float32)
    bias = jnp.zeros((D,), jnp.float32) + 0.1 * jax.random.normal(kb, (D,), jnp.float32)

    out = diagonal(x, weight, bias, min_bytes_for_pallas=0)   # force kernel path
    jax.block_until_ready(out)
    assert jnp.allclose(out, x * weight + bias, atol=1e-6), "mismatch (aligned)"

    # --- Test 2: ragged shapes, no wrapper pad (full-extent blocks) ---------
    x2 = jax.random.normal(jax.random.PRNGKey(1), (10, 100), dtype=jnp.float32)
    w2 = jax.random.normal(jax.random.PRNGKey(2), (100,), dtype=jnp.float32)
    b2 = jax.random.normal(jax.random.PRNGKey(3), (100,), dtype=jnp.float32)
    out2 = diagonal(x2, w2, b2, min_bytes_for_pallas=0)
    jax.block_until_ready(out2)
    assert jnp.allclose(out2, x2 * w2 + b2, atol=1e-6), "mismatch (ragged D)"

    # --- Test 3: ragged batch tail handled by Pallas boundary masking -------
    x3 = jax.random.normal(jax.random.PRNGKey(4), (40, 128), dtype=jnp.float32)
    out3 = diagonal(x3, weight, bias, tile_b=16, min_bytes_for_pallas=0)
    jax.block_until_ready(out3)
    assert jnp.allclose(out3, x3 * weight + bias, atol=1e-6), "mismatch (ragged B)"

    # --- Test 4: bf16 input (dtype-aware tile sizing) ------------------------
    x4 = jax.random.normal(jax.random.PRNGKey(5), (32, 128), dtype=jnp.bfloat16)
    out4 = diagonal(x4, weight, bias, min_bytes_for_pallas=0)
    jax.block_until_ready(out4)
    ref4 = x4 * weight.astype(jnp.bfloat16) + bias.astype(jnp.bfloat16)
    assert jnp.allclose(out4.astype(jnp.float32), ref4.astype(jnp.float32),
                        atol=5e-2), "mismatch (bf16)"

    # --- Test 5: tiny problem short-circuits to the fused jnp path ----------
    x5 = jax.random.normal(jax.random.PRNGKey(6), (2, 32), dtype=jnp.float32)
    w5 = jnp.ones((32,), jnp.float32)
    b5 = jnp.zeros((32,), jnp.float32)
    out5 = diagonal(x5, w5, b5)
    jax.block_until_ready(out5)
    assert jnp.allclose(out5, x5 * w5 + b5, atol=1e-6), "mismatch (tiny path)"

    print("KERNEL_OK")
</pallas_src>

<mosaic_0001>
module attributes {stable_mosaic.version = 11 : i64} {
  func.func @diagonal_kernel(%arg0: i32, %arg1: memref<16x128xf32, #tpu.memory_space<vmem>>, %arg2: memref<2x128xf32, #tpu.memory_space<vmem>>, %arg3: memref<16x128xf32, #tpu.memory_space<vmem>>) attributes {dimension_semantics = [#tpu.dimension_semantics<parallel>], iteration_bounds = array<i64: 1>, scalar_prefetch = 0 : i64, scratch_operands = 0 : i64, tpu.core_type = #tpu.core_type<tc>, window_params = [{transform_indices = @transform_0, window_bounds = array<i64: 16, 128>}, {pipeline_mode = #tpu.pipeline_mode<synchronous>, transform_indices = @transform_1, window_bounds = array<i64: 2, 128>}, {transform_indices = @transform_2, window_bounds = array<i64: 16, 128>}]} {
    %c0 = arith.constant 0 : index
    %c0_0 = arith.constant 0 : index
    %0 = vector.load %arg1[%c0, %c0_0] : memref<16x128xf32, #tpu.memory_space<vmem>>, vector<16x128xf32>
    %c0_1 = arith.constant 0 : index
    %c0_2 = arith.constant 0 : index
    %1 = vector.load %arg2[%c0_1, %c0_2] : memref<2x128xf32, #tpu.memory_space<vmem>>, vector<1x128xf32>
    %c1 = arith.constant 1 : index
    %c0_3 = arith.constant 0 : index
    %2 = vector.load %arg2[%c1, %c0_3] : memref<2x128xf32, #tpu.memory_space<vmem>>, vector<1x128xf32>
    %3 = vector.broadcast %1 : vector<1x128xf32> to vector<16x128xf32>
    %4 = arith.mulf %0, %3 : vector<16x128xf32>
    %5 = vector.broadcast %2 : vector<1x128xf32> to vector<16x128xf32>
    %6 = arith.addf %4, %5 : vector<16x128xf32>
    %c0_4 = arith.constant 0 : index
    %c0_5 = arith.constant 0 : index
    %7 = vector.load %arg3[%c0_4, %c0_5] : memref<16x128xf32, #tpu.memory_space<vmem>>, vector<16x128xf32>
    tpu.vector_store %arg3[%c0_4, %c0_5], %6 {strides = array<i32>} : memref<16x128xf32, #tpu.memory_space<vmem>>, vector<16x128xf32>,
    return
  }
  func.func @transform_0(%arg0: i32) -> (i32, i32) {
    %c0_i32 = arith.constant 0 : i32
    %c0_i32_0 = arith.constant 0 : i32
    return %arg0, %c0_i32 : i32, i32
  }
  func.func @transform_1(%arg0: i32) -> (i32, i32) {
    %c0_i32 = arith.constant 0 : i32
    %c0_i32_0 = arith.constant 0 : i32
    %c0_i32_1 = arith.constant 0 : i32
    return %c0_i32, %c0_i32_0 : i32, i32
  }
  func.func @transform_2(%arg0: i32) -> (i32, i32) {
    %c0_i32 = arith.constant 0 : i32
    %c0_i32_0 = arith.constant 0 : i32
    return %arg0, %c0_i32 : i32, i32
  }
}

</mosaic_0001>

<llo_original>
// kernel: tpu_custom_call.1
$region0: #{tpu_custom_call.1}
  #allocation0 [shape = 'u32[]', space=smem, size = 0x4, offset = 0x4, fixed_abs, tag = 'smem constant byte address 0x4 - core index']
  #allocation1 [shape = 'u32[144,128]{1,0:T(1,128)}', space=vmem, size = 0x12000, scoped, tag = 'internal scratch']
  %s0 = inlined_call_operand.hbm [shape: f32[16,128], index: 0, kind: input, shape index: {}]
  %s1 = inlined_call_operand.hbm [shape: f32[2,128], index: 1, kind: input, shape index: {}]
  %s2 = inlined_call_operand.hbm [shape: f32[16,128], index: 2, kind: output, shape index: {}]
  %s3 = sld [smem:[#allocation0]]
  $region26: #{tpu_custom_call.1} parent=0
    _
  %s5 = ssub.s32 1, %s3
  %s6 = scalar_select 0, %s5, %s3
  $region1: #{tpu_custom_call.1} parent=0
    #allocation2 [shape = 'u8[8192]{0}', space=vmem, size = 0x2000, scoped, tag = 'input window, operand 0, single buffered']
    #allocation3 [shape = 's32[1]{0}', space=sflag, size = 0x4, scoped, tag = 'scoped memory for tpu_custom_call.1']
    #allocation4 [shape = 's32[1]{0}', space=sflag, size = 0x4, scoped, tag = 'scoped memory for tpu_custom_call.1']
    #allocation5 [shape = 'u8[1024]{0}', space=vmem, size = 0x400, scoped, tag = 'input window, operand 1, single buffered']
    #allocation6 [shape = 's32[1]{0}', space=sflag, size = 0x4, scoped, tag = 'scoped memory for tpu_custom_call.1']
    #allocation7 [shape = 'u8[8192]{0}', space=vmem, size = 0x2000, scoped, tag = 'output window, operand 0, single buffered']
    %7 = vsyncpa [#allocation3], 0
    %8 = vsyncpa [#allocation6], 0
    %9 = vsyncpa [#allocation4], 0
    // Predicated region
    $region2: #{tpu_custom_call.1} parent=1 // pred_check
      _
    $region3: #{tpu_custom_call.1} parent=1 // pred_check_branch
      %11 = sbr.rel (0) target = $region5
    $region4: #{tpu_custom_call.1} parent=1 // pred_region
      %s13 = ssub.s32 256, 256
      %14 = vsyncadd [#allocation3], %s13
      %s15 = sshll.u32 [#allocation2], 4
      %s16 = int_to_ptr.vmem [resolvable:$true] %s15
      %21 = dma.hbm_to_vmem [thread:$0]  %s0, 256, %s16, [#allocation3], 128, 128, 8
    $region5: #{tpu_custom_call.1} parent=1 // pred_fallthru
      _
    // Predicated region
    $region6: #{tpu_custom_call.1} parent=1 // pred_check
      _
    $region7: #{tpu_custom_call.1} parent=1 // pred_check_branch
      %23 = sbr.rel (0) target = $region9
    $region8: #{tpu_custom_call.1} parent=1 // pred_region
      %s25 = ssub.s32 32, 32
      %26 = vsyncadd [#allocation6], %s25
      %s28 = sshll.u32 [#allocation5], 4
      %s29 = int_to_ptr.vmem [resolvable:$true] %s28
      %31 = dma.hbm_to_vmem [thread:$0]  %s1, 32, %s29, [#allocation6]
    $region9: #{tpu_custom_call.1} parent=1 // pred_fallthru
      _
    // Predicated region
    $region10: #{tpu_custom_call.1} parent=1 // pred_check
      _
    $region11: #{tpu_custom_call.1} parent=1 // pred_check_branch
      %33 = sbr.rel (0) target = $region13
    $region12: #{tpu_custom_call.1} parent=1 // pred_region
      %34 = dma.done [#allocation3], 256
    $region13: #{tpu_custom_call.1} parent=1 // pred_fallthru
      _
    // Predicated region
    $region14: #{tpu_custom_call.1} parent=1 // pred_check
      _
    $region15: #{tpu_custom_call.1} parent=1 // pred_check_branch
      %36 = sbr.rel (0) target = $region17
    $region16: #{tpu_custom_call.1} parent=1 // pred_region
      %37 = dma.done [#allocation6], 32
    $region17: #{tpu_custom_call.1} parent=1 // pred_fallthru
      _
    %v38 = vld [vmem:[#allocation2] sm:$0xff]
    %v39 = vld [vmem:[#allocation2 + $0x8] sm:$0xff]
    %v40 = vld [vmem:[#allocation5] sm:$0x1]
    %v41 = vld [vmem:[#allocation5 + $0x1] sm:$0x1]
    %v42 = vlaneseq
    %v43 = vshrl.u32 %v42, 7
    %v44 = vsub.s32 0, %v43
    %v45 = vrot.slane %v40, %v44
    %v46 = vmul.f32 %v38, %v45
    %v47 = vmul.f32 %v39, %v45
    %v48 = vlaneseq
    %v49 = vshrl.u32 %v48, 7
    %v50 = vsub.s32 0, %v49
    %v51 = vrot.slane %v41, %v50
    %v52 = vadd.f32 %v46, %v51
    %v53 = vadd.f32 %v47, %v51
    %54 = vst [vmem:[#allocation7] sm:$0xff] %v52
    %55 = vst [vmem:[#allocation7 + $0x8] sm:$0xff] %v53
    // Predicated region
    $region18: #{tpu_custom_call.1} parent=1 // pred_check
      _
    $region19: #{tpu_custom_call.1} parent=1 // pred_check_branch
      %57 = sbr.rel (0) target = $region21
    $region20: #{tpu_custom_call.1} parent=1 // pred_region
      %s59 = ssub.s32 256, 256
      %60 = vsyncadd [#allocation4], %s59
      %s61 = sshll.u32 [#allocation7], 4
      %s62 = int_to_ptr.vmem [resolvable:$true] %s61
      %67 = dma.vmem_to_hbm [thread:$0]  %s62, 256, %s2, [#allocation4], 128, 128, 8
    $region21: #{tpu_custom_call.1} parent=1 // pred_fallthru
      _
    // Predicated region
    $region22: #{tpu_custom_call.1} parent=1 // pred_check
      _
    $region23: #{tpu_custom_call.1} parent=1 // pred_check_branch
      %69 = sbr.rel (0) target = $region25
    $region24: #{tpu_custom_call.1} parent=1 // pred_region
      %70 = dma.done [#allocation4], 256
    $region25: #{tpu_custom_call.1} parent=1 // pred_fallthru
      _
    %71 = vsyncpa [#allocation3], 1
    %72 = vsyncpa [#allocation6], 1
    %73 = vsyncpa [#allocation4], 1

</llo_original>
